<compile_context>
chip_gen: v7x
topology: tpu7x:2x2x1
jax: 0.10.0
libtpu: 0.0.40
codegen_flags: <defaults>
</compile_context>

<pallas_src>
import jax
import jax.numpy as jnp
from jax.experimental import pallas as pl
from jax.experimental.pallas import tpu as pltpu


def _swish_kernel(x_ref, o_ref):
    x = x_ref[...]
    xf = x.astype(jnp.float32)            # compute in f32 (VPU + EUP)
    y = xf * jax.nn.sigmoid(xf)
    o_ref[...] = y.astype(o_ref.dtype)    # store back in the I/O dtype


def swish(x: jax.Array) -> jax.Array:
    """Elementwise swish via a Pallas TPU kernel. Accepts any shape/dtype."""
    orig_shape = x.shape
    orig_dtype = x.dtype
    n = x.size
    if n == 0:
        return x

    itemsize = jnp.dtype(orig_dtype).itemsize
    # sublane packing: 8 rows for 32-bit, 16 for 16-bit, 32 for 8-bit dtypes
    sub = max(8, 32 // max(itemsize, 1))

    LANE = 1024                             # lane-dense width, multiple of 128
    TARGET_BLOCK_BYTES = 2 * 1024 * 1024    # ~2 MiB per block
    block_rows = (TARGET_BLOCK_BYTES // (LANE * itemsize)) // sub * sub
    block_rows = max(block_rows, sub)

    # Flatten and pad to a whole number of (sub)-aligned rows of width LANE.
    flat = x.reshape(-1)
    rows = pl.cdiv(n, LANE)
    rows_p = pl.cdiv(rows, sub) * sub
    pad = rows_p * LANE - n
    if pad:
        flat = jnp.pad(flat, (0, pad))
    x2 = flat.reshape(rows_p, LANE)

    # If the whole (padded) array is smaller than one block, shrink the block.
    block_rows = min(block_rows, rows_p)

    grid = (pl.cdiv(rows_p, block_rows),)   # partial last block handled by Pallas

    out = pl.pallas_call(
        _swish_kernel,
        out_shape=jax.ShapeDtypeStruct((rows_p, LANE), orig_dtype),
        grid_spec=pltpu.PrefetchScalarGridSpec(
            num_scalar_prefetch=0,
            grid=grid,
            in_specs=[pl.BlockSpec((block_rows, LANE), lambda i: (i, 0))],
            out_specs=pl.BlockSpec((block_rows, LANE), lambda i: (i, 0)),
        ),
        compiler_params=pltpu.CompilerParams(
            dimension_semantics=("parallel",),
            vmem_limit_bytes=32 * 1024 * 1024,
        ),
    )(x2)

    return out.reshape(-1)[:n].reshape(orig_shape)


if __name__ == "__main__":
    key = jax.random.PRNGKey(0)
    # NCHW input consistent with a typical conv-activation use of Swish.
    x = jax.random.normal(key, (2, 4, 16, 16), dtype=jnp.float32)

    y = swish(x)
    y = jax.block_until_ready(y)

    # Reference check in plain JAX.
    y_ref = x * jax.nn.sigmoid(x)
    assert y.shape == x.shape and y.dtype == x.dtype
    assert jnp.allclose(y, y_ref, atol=1e-6, rtol=1e-6)

    # Also sanity-check a bf16 path and a shape that doesn't divide nicely.
    xb = jax.random.normal(jax.random.PRNGKey(1), (3, 5, 7, 11), dtype=jnp.bfloat16)
    yb = jax.block_until_ready(swish(xb))
    yb_ref = xb.astype(jnp.float32) * jax.nn.sigmoid(xb.astype(jnp.float32))
    assert yb.shape == xb.shape and yb.dtype == xb.dtype
    assert jnp.allclose(yb.astype(jnp.float32), yb_ref, atol=2e-2, rtol=2e-2)

    print("KERNEL_OK")
</pallas_src>

<mosaic_0001>
module attributes {stable_mosaic.version = 11 : i64} {
  func.func @_swish_kernel(%arg0: i32, %arg1: memref<8x1024xf32, #tpu.memory_space<vmem>>, %arg2: memref<8x1024xf32, #tpu.memory_space<vmem>>) attributes {dimension_semantics = [#tpu.dimension_semantics<parallel>], iteration_bounds = array<i64: 1>, scalar_prefetch = 0 : i64, scratch_operands = 0 : i64, tpu.core_type = #tpu.core_type<tc>, window_params = [{transform_indices = @transform_0, window_bounds = array<i64: 8, 1024>}, {transform_indices = @transform_1, window_bounds = array<i64: 8, 1024>}]} {
    %c0 = arith.constant 0 : index
    %c0_0 = arith.constant 0 : index
    %0 = vector.load %arg1[%c0, %c0_0] : memref<8x1024xf32, #tpu.memory_space<vmem>>, vector<8x1024xf32>
    %1 = arith.negf %0 : vector<8x1024xf32>
    %2 = math.exp %1 : vector<8x1024xf32>
    %cst = arith.constant 1.000000e+00 : f32
    %3 = vector.broadcast %cst : f32 to vector<8x1024xf32>
    %4 = arith.addf %3, %2 : vector<8x1024xf32>
    %5 = arith.divf %3, %4 : vector<8x1024xf32>
    %6 = arith.mulf %0, %5 : vector<8x1024xf32>
    %c0_1 = arith.constant 0 : index
    %c0_2 = arith.constant 0 : index
    %7 = vector.load %arg2[%c0_1, %c0_2] : memref<8x1024xf32, #tpu.memory_space<vmem>>, vector<8x1024xf32>
    tpu.vector_store %arg2[%c0_1, %c0_2], %6 {strides = array<i32>} : memref<8x1024xf32, #tpu.memory_space<vmem>>, vector<8x1024xf32>,
    return
  }
  func.func @transform_0(%arg0: i32) -> (i32, i32) {
    %c0_i32 = arith.constant 0 : i32
    %c0_i32_0 = arith.constant 0 : i32
    return %arg0, %c0_i32 : i32, i32
  }
  func.func @transform_1(%arg0: i32) -> (i32, i32) {
    %c0_i32 = arith.constant 0 : i32
    %c0_i32_0 = arith.constant 0 : i32
    return %arg0, %c0_i32 : i32, i32
  }
}

</mosaic_0001>

<llo_original>
// kernel: tpu_custom_call.1
$region0: #{tpu_custom_call.1}
  #allocation0 [shape = 'u32[]', space=smem, size = 0x4, offset = 0x4, fixed_abs, tag = 'smem constant byte address 0x4 - core index']
  #allocation1 [shape = 'u32[144,128]{1,0:T(1,128)}', space=vmem, size = 0x12000, scoped, tag = 'internal scratch']
  %s0 = inlined_call_operand.hbm [shape: f32[8,1024], index: 0, kind: input, shape index: {}]
  %s1 = inlined_call_operand.hbm [shape: f32[8,1024], index: 1, kind: output, shape index: {}]
  %s2 = sld [smem:[#allocation0]]
  $region18: #{tpu_custom_call.1} parent=0
    _
  %s4 = ssub.s32 1, %s2
  %s5 = scalar_select 0, %s4, %s2
  $region1: #{tpu_custom_call.1} parent=0
    #allocation2 [shape = 'u8[32768]{0}', space=vmem, size = 0x8000, scoped, tag = 'input window, operand 0, single buffered']
    #allocation3 [shape = 's32[1]{0}', space=sflag, size = 0x4, scoped, tag = 'scoped memory for tpu_custom_call.1']
    #allocation4 [shape = 's32[1]{0}', space=sflag, size = 0x4, scoped, tag = 'scoped memory for tpu_custom_call.1']
    #allocation5 [shape = 'u8[32768]{0}', space=vmem, size = 0x8000, scoped, tag = 'output window, operand 0, single buffered']
    %6 = vsyncpa [#allocation3], 0
    %7 = vsyncpa [#allocation4], 0
    // Predicated region
    $region2: #{tpu_custom_call.1} parent=1 // pred_check
      _
    $region3: #{tpu_custom_call.1} parent=1 // pred_check_branch
      %9 = sbr.rel (0) target = $region5
    $region4: #{tpu_custom_call.1} parent=1 // pred_region
      %s11 = ssub.s32 1024, 1024
      %12 = vsyncadd [#allocation3], %s11
      %s14 = sshll.u32 [#allocation2], 4
      %s15 = int_to_ptr.vmem [resolvable:$true] %s14
      %17 = dma.hbm_to_vmem [thread:$0]  %s0, 1024, %s15, [#allocation3]
    $region5: #{tpu_custom_call.1} parent=1 // pred_fallthru
      _
    // Predicated region
    $region6: #{tpu_custom_call.1} parent=1 // pred_check
      _
    $region7: #{tpu_custom_call.1} parent=1 // pred_check_branch
      %19 = sbr.rel (0) target = $region9
    $region8: #{tpu_custom_call.1} parent=1 // pred_region
      %20 = dma.done [#allocation3], 1024
    $region9: #{tpu_custom_call.1} parent=1 // pred_fallthru
      _
    %v21 = vld [vmem:[#allocation2] sm:$0xff]
    %v22 = vld [vmem:[#allocation2 + $0x8] sm:$0xff]
    %v23 = vld [vmem:[#allocation2 + $0x10] sm:$0xff]
    %v24 = vld [vmem:[#allocation2 + $0x18] sm:$0xff]
    %v25 = vld [vmem:[#allocation2 + $0x20] sm:$0xff]
    %v26 = vld [vmem:[#allocation2 + $0x28] sm:$0xff]
    %v27 = vld [vmem:[#allocation2 + $0x30] sm:$0xff]
    %v28 = vld [vmem:[#allocation2 + $0x38] sm:$0xff]
    %v29 = vxor.u32 %v21, 2147483648
    %v30 = vxor.u32 %v22, 2147483648
    %v31 = vxor.u32 %v23, 2147483648
    %v32 = vxor.u32 %v24, 2147483648
    %v33 = vxor.u32 %v25, 2147483648
    %v34 = vxor.u32 %v26, 2147483648
    %v35 = vxor.u32 %v27, 2147483648
    %v36 = vxor.u32 %v28, 2147483648
    %v37 = vmul.f32 %v29, 1.442695
    %v38 = vpow.pop %v37
    %v39 = vmul.f32 %v30, 1.442695
    %v40 = vpow.pop %v39
    %v41 = vmul.f32 %v31, 1.442695
    %v42 = vpow.pop %v41
    %v43 = vmul.f32 %v32, 1.442695
    %v44 = vpow.pop %v43
    %v45 = vmul.f32 %v33, 1.442695
    %v46 = vpow.pop %v45
    %v47 = vmul.f32 %v34, 1.442695
    %v48 = vpow.pop %v47
    %v49 = vmul.f32 %v35, 1.442695
    %v50 = vpow.pop %v49
    %v51 = vmul.f32 %v36, 1.442695
    %v52 = vpow.pop %v51
    %v53 = vadd.f32 %v38, 1.0
    %v54 = vadd.f32 %v40, 1.0
    %v55 = vadd.f32 %v42, 1.0
    %v56 = vadd.f32 %v44, 1.0
    %v57 = vadd.f32 %v46, 1.0
    %v58 = vadd.f32 %v48, 1.0
    %v59 = vadd.f32 %v50, 1.0
    %v60 = vadd.f32 %v52, 1.0
    %v61 = vrcp.pop %v53
    %v62 = vmul.f32 1.0, %v61
    %v63 = vrcp.pop %v54
    %v64 = vmul.f32 1.0, %v63
    %v65 = vrcp.pop %v55
    %v66 = vmul.f32 1.0, %v65
    %v67 = vrcp.pop %v56
    %v68 = vmul.f32 1.0, %v67
    %v69 = vrcp.pop %v57
    %v70 = vmul.f32 1.0, %v69
    %v71 = vrcp.pop %v58
    %v72 = vmul.f32 1.0, %v71
    %v73 = vrcp.pop %v59
    %v74 = vmul.f32 1.0, %v73
    %v75 = vrcp.pop %v60
    %v76 = vmul.f32 1.0, %v75
    %v77 = vmul.f32 %v21, %v62
    %v78 = vmul.f32 %v22, %v64
    %v79 = vmul.f32 %v23, %v66
    %v80 = vmul.f32 %v24, %v68
    %v81 = vmul.f32 %v25, %v70
    %v82 = vmul.f32 %v26, %v72
    %v83 = vmul.f32 %v27, %v74
    %v84 = vmul.f32 %v28, %v76
    %85 = vst [vmem:[#allocation5] sm:$0xff] %v77
    %86 = vst [vmem:[#allocation5 + $0x8] sm:$0xff] %v78
    %87 = vst [vmem:[#allocation5 + $0x10] sm:$0xff] %v79
    %88 = vst [vmem:[#allocation5 + $0x18] sm:$0xff] %v80
    %89 = vst [vmem:[#allocation5 + $0x20] sm:$0xff] %v81
    %90 = vst [vmem:[#allocation5 + $0x28] sm:$0xff] %v82
    %91 = vst [vmem:[#allocation5 + $0x30] sm:$0xff] %v83
    %92 = vst [vmem:[#allocation5 + $0x38] sm:$0xff] %v84
    // Predicated region
    $region10: #{tpu_custom_call.1} parent=1 // pred_check
      _
    $region11: #{tpu_custom_call.1} parent=1 // pred_check_branch
      %94 = sbr.rel (0) target = $region13
    $region12: #{tpu_custom_call.1} parent=1 // pred_region
      %s96 = ssub.s32 1024, 1024
      %97 = vsyncadd [#allocation4], %s96
      %s99 = sshll.u32 [#allocation5], 4
      %s100 = int_to_ptr.vmem [resolvable:$true] %s99
      %102 = dma.vmem_to_hbm [thread:$0]  %s100, 1024, %s1, [#allocation4]
    $region13: #{tpu_custom_call.1} parent=1 // pred_fallthru
      _
    // Predicated region
    $region14: #{tpu_custom_call.1} parent=1 // pred_check
      _
    $region15: #{tpu_custom_call.1} parent=1 // pred_check_branch
      %104 = sbr.rel (0) target = $region17
    $region16: #{tpu_custom_call.1} parent=1 // pred_region
      %105 = dma.done [#allocation4], 1024
    $region17: #{tpu_custom_call.1} parent=1 // pred_fallthru
      _
    %106 = vsyncpa [#allocation3], 1
    %107 = vsyncpa [#allocation4], 1

</llo_original>
